<compile_context>
chip_gen: v7x
topology: tpu7x:2x2x1
jax: 0.10.0
libtpu: 0.0.40
codegen_flags: <defaults>
</compile_context>

<pallas_src>
import jax
import jax.numpy as jnp
from jax.experimental import pallas as pl
from jax.experimental.pallas import tpu as pltpu

BN_EPS = 1e-5


def _make_kernel(hw, block_samples, tr):
    inv_hw = 1.0 / float(hw)

    def kernel(x_ref, w1_ref, bnp_ref, w2_ref, out_ref, h_ref, pool_ref):
        k = pl.program_id(0)       # C-tile index (outer -> W1 tile DMA'd once per k)
        r = pl.program_id(1)       # sample-tile index (inner)
        nk = pl.num_programs(0)
        nr = pl.num_programs(1)

        # Block-diagonal mean-pooling matrix: built once on the first grid step,
        # identical for every subsequent step / row tile.
        @pl.when(jnp.logical_and(k == 0, r == 0))
        def _():
            col = jax.lax.broadcasted_iota(jnp.int32, (block_samples, tr), 1)
            row = jax.lax.broadcasted_iota(jnp.int32, (block_samples, tr), 0)
            in_sample = jnp.logical_and(col >= row * hw, col < (row + 1) * hw)
            pool_ref[...] = jnp.where(in_sample, inv_hw, 0.0).astype(jnp.float32)

        # Pool FIRST (HW-fold fewer MXU flops than matmul-then-pool), then project:
        #   (bs, bs*HW) @ (bs*HW, Ct) -> (bs, Ct);  (bs, Ct) @ (Ct, P) -> (bs, P)
        pooled = jnp.dot(pool_ref[...], x_ref[...], preferred_element_type=jnp.float32)
        partial = jnp.dot(pooled, w1_ref[...], preferred_element_type=jnp.float32)

        start = pl.multiple_of(r * block_samples, block_samples)

        @pl.when(k == 0)
        def _():
            h_ref[pl.ds(start, block_samples), :] = partial

        @pl.when(k != 0)
        def _():
            h_ref[pl.ds(start, block_samples), :] += partial

        # Final grid step: + b1, BatchNorm1d (training-mode batch stats), ReLU, Linear(P,D).
        @pl.when(jnp.logical_and(k == nk - 1, r == nr - 1))
        def _():
            # b1 added before BN for fidelity (batch-mean subtraction cancels it).
            h = h_ref[...] + bnp_ref[0:1, :]                       # (N, P)
            mu = jnp.mean(h, axis=0, keepdims=True)
            var = jnp.mean((h - mu) * (h - mu), axis=0, keepdims=True)
            hn = (h - mu) * jax.lax.rsqrt(var + BN_EPS)            # rsqrt -> EUP slot
            hn = hn * bnp_ref[1:2, :] + bnp_ref[2:3, :]
            hn = jnp.maximum(hn, 0.0)
            out_ref[...] = jnp.dot(
                hn, w2_ref[...], preferred_element_type=jnp.float32
            ).astype(out_ref.dtype)

    return kernel


def encoder_with_projection_forward(res5_nhwc, w1, b1, gamma, beta, w2,
                                    *, block_samples=None, block_c=None):
    """BYOL projection head applied to a res5 feature map.

    res5_nhwc: (N, H, W, C) float32 features (C = 2048 for ResNet-50).
    w1: (C, P), b1/gamma/beta: (P,), w2: (P, D).  Returns (N, D) float32.
    """
    N, H, W, C = res5_nhwc.shape
    HW = H * W
    P = w1.shape[1]
    D = w2.shape[1]

    if block_c is None:
        block_c = min(C, 512)
    assert C % block_c == 0 and (block_c % 128 == 0 or block_c == C)

    if block_samples is None:
        # Cover whole samples per row tile while keeping the x block <= ~4 MiB.
        block_samples = N
        while block_samples > 1 and block_samples * HW * block_c * 4 > (4 << 20):
            block_samples //= 2
    assert N % block_samples == 0
    tr = block_samples * HW
    assert tr % 8 == 0 or block_samples == N, \
        "block_samples * H * W must be a multiple of 8 (or block_samples == N)"

    rows = N * HW
    x2d = res5_nhwc.reshape(rows, C)                   # free reshape, no HBM transpose
    bn_params = jnp.stack([b1, gamma, beta], axis=0)   # (3, P): single small DMA

    # C-tiles outer (W1 DMA'd once), row-tiles inner (x blocks pipelined every step).
    grid = (C // block_c, N // block_samples)

    # Double-buffered x / W1 blocks + small constants + scratch; cap at v7x's 64 MiB.
    vmem_bytes = 4 * (
        2 * tr * block_c                    # pipelined x blocks
        + 2 * block_c * P                   # pipelined W1 blocks
        + 2 * (3 * P + P * D + N * D)       # bn params, W2, output
        + N * P + block_samples * tr        # h scratch + pooling matrix
    )
    vmem_limit = int(min(max(vmem_bytes + (4 << 20), 16 << 20), 64 << 20))

    kernel = _make_kernel(HW, block_samples, tr)

    return pl.pallas_call(
        kernel,
        out_shape=jax.ShapeDtypeStruct((N, D), jnp.float32),
        grid_spec=pltpu.PrefetchScalarGridSpec(
            num_scalar_prefetch=0,
            grid=grid,
            in_specs=[
                pl.BlockSpec((tr, block_c), lambda k, r: (r, k)),   # x rows x C tile
                pl.BlockSpec((block_c, P), lambda k, r: (k, 0)),    # W1 C tile
                pl.BlockSpec((3, P), lambda k, r: (0, 0)),          # [b1; gamma; beta]
                pl.BlockSpec((P, D), lambda k, r: (0, 0)),          # W2
            ],
            out_specs=pl.BlockSpec((N, D), lambda k, r: (0, 0)),
            scratch_shapes=[
                pltpu.VMEM((N, P), jnp.float32),                 # pooled pre-BN activations
                pltpu.VMEM((block_samples, tr), jnp.float32),    # block-diag pooling matrix
            ],
        ),
        compiler_params=pltpu.CompilerParams(
            # Both axes carry state (h scratch, single output block) -> arbitrary.
            dimension_semantics=("arbitrary", "arbitrary"),
            vmem_limit_bytes=vmem_limit,
        ),
    )(x2d, w1, bn_params, w2)


def _reference(res5_nhwc, w1, b1, gamma, beta, w2):
    emb = jnp.mean(res5_nhwc, axis=(1, 2))            # AdaptiveAvgPool2d((1,1)) + flatten
    h = emb @ w1 + b1
    mu = jnp.mean(h, axis=0, keepdims=True)
    var = jnp.mean((h - mu) ** 2, axis=0, keepdims=True)
    h = (h - mu) / jnp.sqrt(var + BN_EPS)
    h = h * gamma + beta
    h = jnp.maximum(h, 0.0)
    return h @ w2


if __name__ == "__main__":
    # Small shapes consistent with the module: res5 has 2048 channels (fixed by
    # Linear(2048, proj_dim)); proj_dim / out_dim are config values -> small here.
    N, H, W, C = 8, 4, 4, 2048
    PROJ_DIM, OUT_DIM = 128, 64

    key = jax.random.PRNGKey(0)
    kx, k1, k1b, k2 = jax.random.split(key, 4)

    x = jax.random.normal(kx, (N, H, W, C), dtype=jnp.float32)   # res5 in NHWC

    # Deterministic parameter init (PyTorch-Linear-like uniform scales).
    bound1 = 1.0 / (C ** 0.5)
    w1 = jax.random.uniform(k1, (C, PROJ_DIM), minval=-bound1, maxval=bound1,
                            dtype=jnp.float32)
    b1 = jax.random.uniform(k1b, (PROJ_DIM,), minval=-bound1, maxval=bound1,
                            dtype=jnp.float32)
    gamma = jnp.ones((PROJ_DIM,), dtype=jnp.float32)
    beta = jnp.zeros((PROJ_DIM,), dtype=jnp.float32)
    bound2 = 1.0 / (PROJ_DIM ** 0.5)
    w2 = jax.random.uniform(k2, (PROJ_DIM, OUT_DIM), minval=-bound2, maxval=bound2,
                            dtype=jnp.float32)

    # block_samples=4, block_c=512 -> grid (4 C-tiles, 2 row-tiles): exercises C
    # accumulation, row tiling, and pooling-matrix reuse across steps.
    out = encoder_with_projection_forward(x, w1, b1, gamma, beta, w2,
                                          block_samples=4, block_c=512)
    out = jax.block_until_ready(out)

    ref = _reference(x, w1, b1, gamma, beta, w2)
    assert out.shape == (N, OUT_DIM)
    assert jnp.allclose(out, ref, atol=1e-3, rtol=1e-3), "mismatch vs reference"

    print("KERNEL_OK")
</pallas_src>

<mosaic_0001>
module attributes {stable_mosaic.version = 11 : i64} {
  func.func @kernel(%arg0: i32, %arg1: i32, %arg2: memref<64x512xf32, #tpu.memory_space<vmem>>, %arg3: memref<512x128xf32, #tpu.memory_space<vmem>>, %arg4: memref<3x128xf32, #tpu.memory_space<vmem>>, %arg5: memref<128x64xf32, #tpu.memory_space<vmem>>, %arg6: memref<8x64xf32, #tpu.memory_space<vmem>>, %arg7: memref<8x128xf32, #tpu.memory_space<vmem>>, %arg8: memref<4x64xf32, #tpu.memory_space<vmem>>) attributes {dimension_semantics = [#tpu.dimension_semantics<arbitrary>, #tpu.dimension_semantics<arbitrary>], iteration_bounds = array<i64: 4, 2>, scalar_prefetch = 0 : i64, scratch_operands = 2 : i64, tpu.core_type = #tpu.core_type<tc>, window_params = [{transform_indices = @transform_0, window_bounds = array<i64: 64, 512>}, {transform_indices = @transform_1, window_bounds = array<i64: 512, 128>}, {pipeline_mode = #tpu.pipeline_mode<synchronous>, transform_indices = @transform_2, window_bounds = array<i64: 3, 128>}, {pipeline_mode = #tpu.pipeline_mode<synchronous>, transform_indices = @transform_3, window_bounds = array<i64: 128, 64>}, {pipeline_mode = #tpu.pipeline_mode<synchronous>, transform_indices = @transform_4, window_bounds = array<i64: 8, 64>}]} {
    %c0_i32 = arith.constant 0 : i32
    %0 = arith.cmpi eq, %arg0, %c0_i32 : i32
    %c0_i32_0 = arith.constant 0 : i32
    %1 = arith.cmpi eq, %arg1, %c0_i32_0 : i32
    %2 = arith.andi %0, %1 : i1
    %3 = arith.extui %2 : i1 to i32
    %c0_i32_1 = arith.constant 0 : i32
    %4 = arith.cmpi ne, %3, %c0_i32_1 : i32
    scf.if %4 {
      %23 = tpu.iota {dimensions = array<i32: 1>} : vector<4x64xi32>
      %24 = tpu.iota {dimensions = array<i32: 0>} : vector<4x64xi32>
      %c16_i32 = arith.constant 16 : i32
      %25 = vector.broadcast %c16_i32 : i32 to vector<4x64xi32>
      %26 = arith.muli %24, %25 : vector<4x64xi32>
      %27 = arith.cmpi sge, %23, %26 : vector<4x64xi32>
      %c1_i32_13 = arith.constant 1 : i32
      %28 = vector.broadcast %c1_i32_13 : i32 to vector<4x64xi32>
      %29 = arith.addi %24, %28 : vector<4x64xi32>
      %c16_i32_14 = arith.constant 16 : i32
      %30 = vector.broadcast %c16_i32_14 : i32 to vector<4x64xi32>
      %31 = arith.muli %29, %30 : vector<4x64xi32>
      %32 = arith.cmpi slt, %23, %31 : vector<4x64xi32>
      %33 = arith.andi %27, %32 : vector<4x64xi1>
      %cst_15 = arith.constant 6.250000e-02 : f32
      %cst_16 = arith.constant 0.000000e+00 : f32
      %34 = vector.broadcast %cst_15 : f32 to vector<4x64xf32>
      %35 = vector.broadcast %cst_16 : f32 to vector<4x64xf32>
      %36 = arith.select %33, %34, %35 : vector<4x64xi1>, vector<4x64xf32>
      %c0_17 = arith.constant 0 : index
      %c0_18 = arith.constant 0 : index
      %37 = vector.load %arg8[%c0_17, %c0_18] : memref<4x64xf32, #tpu.memory_space<vmem>>, vector<4x64xf32>
      tpu.vector_store %arg8[%c0_17, %c0_18], %36 {strides = array<i32>} : memref<4x64xf32, #tpu.memory_space<vmem>>, vector<4x64xf32>,
    } else {
    }
    %c0 = arith.constant 0 : index
    %c0_2 = arith.constant 0 : index
    %5 = vector.load %arg8[%c0, %c0_2] : memref<4x64xf32, #tpu.memory_space<vmem>>, vector<4x64xf32>
    %c0_3 = arith.constant 0 : index
    %c0_4 = arith.constant 0 : index
    %6 = vector.load %arg2[%c0_3, %c0_4] : memref<64x512xf32, #tpu.memory_space<vmem>>, vector<64x512xf32>
    %cst = arith.constant dense<0.000000e+00> : vector<4x512xf32>
    %7 = tpu.matmul %5, %6, %cst {dimension_numbers = #tpu.dot_dimension_numbers<[1], [0], [0], [1], [0, 0, 1, 1], [], []>} : vector<4x64xf32>, vector<64x512xf32>, vector<4x512xf32> -> vector<4x512xf32>
    %c0_5 = arith.constant 0 : index
    %c0_6 = arith.constant 0 : index
    %8 = vector.load %arg3[%c0_5, %c0_6] : memref<512x128xf32, #tpu.memory_space<vmem>>, vector<512x128xf32>
    %cst_7 = arith.constant dense<0.000000e+00> : vector<4x128xf32>
    %9 = tpu.matmul %7, %8, %cst_7 {dimension_numbers = #tpu.dot_dimension_numbers<[1], [0], [0], [1], [0, 0, 1, 1], [], []>} : vector<4x512xf32>, vector<512x128xf32>, vector<4x128xf32> -> vector<4x128xf32>
    %c4_i32 = arith.constant 4 : i32
    %10 = arith.muli %arg1, %c4_i32 : i32
    %11 = tpu.assume_multiple %10, 4 : i32
    %c0_i32_8 = arith.constant 0 : i32
    %12 = arith.cmpi eq, %arg0, %c0_i32_8 : i32
    %13 = arith.extui %12 : i1 to i32
    %c0_i32_9 = arith.constant 0 : i32
    %14 = arith.cmpi ne, %13, %c0_i32_9 : i32
    scf.if %14 {
      %23 = arith.index_cast %11 : i32 to index
      %c0_13 = arith.constant 0 : index
      %24 = vector.load %arg7[%23, %c0_13] : memref<8x128xf32, #tpu.memory_space<vmem>>, vector<4x128xf32>
      tpu.vector_store %arg7[%23, %c0_13], %9 {strides = array<i32>} : memref<8x128xf32, #tpu.memory_space<vmem>>, vector<4x128xf32>,
    } else {
    }
    %c0_i32_10 = arith.constant 0 : i32
    %15 = arith.cmpi ne, %arg0, %c0_i32_10 : i32
    %16 = arith.extui %15 : i1 to i32
    %c0_i32_11 = arith.constant 0 : i32
    %17 = arith.cmpi ne, %16, %c0_i32_11 : i32
    scf.if %17 {
      %23 = arith.index_cast %11 : i32 to index
      %c0_13 = arith.constant 0 : index
      %24 = vector.load %arg7[%23, %c0_13] : memref<8x128xf32, #tpu.memory_space<vmem>>, vector<4x128xf32>
      %25 = arith.addf %24, %9 : vector<4x128xf32>
      %26 = arith.index_cast %11 : i32 to index
      %c0_14 = arith.constant 0 : index
      %27 = vector.load %arg7[%26, %c0_14] : memref<8x128xf32, #tpu.memory_space<vmem>>, vector<4x128xf32>
      tpu.vector_store %arg7[%26, %c0_14], %25 {strides = array<i32>} : memref<8x128xf32, #tpu.memory_space<vmem>>, vector<4x128xf32>,
    } else {
    }
    %c3_i32 = arith.constant 3 : i32
    %18 = arith.cmpi eq, %arg0, %c3_i32 : i32
    %c1_i32 = arith.constant 1 : i32
    %19 = arith.cmpi eq, %arg1, %c1_i32 : i32
    %20 = arith.andi %18, %19 : i1
    %21 = arith.extui %20 : i1 to i32
    %c0_i32_12 = arith.constant 0 : i32
    %22 = arith.cmpi ne, %21, %c0_i32_12 : i32
    scf.if %22 {
      %c0_13 = arith.constant 0 : index
      %c0_14 = arith.constant 0 : index
      %23 = vector.load %arg7[%c0_13, %c0_14] : memref<8x128xf32, #tpu.memory_space<vmem>>, vector<8x128xf32>
      %c0_15 = arith.constant 0 : index
      %c0_16 = arith.constant 0 : index
      %24 = vector.load %arg4[%c0_15, %c0_16] : memref<3x128xf32, #tpu.memory_space<vmem>>, vector<1x128xf32>
      %25 = vector.broadcast %24 : vector<1x128xf32> to vector<8x128xf32>
      %26 = arith.addf %23, %25 : vector<8x128xf32>
      %cst_17 = arith.constant dense<0.000000e+00> : vector<128xf32>
      %27 = vector.multi_reduction <add>, %26, %cst_17 [0] : vector<8x128xf32> to vector<128xf32>
      %28 = vector.shape_cast %27 : vector<128xf32> to vector<1x128xf32>
      %cst_18 = arith.constant 8.000000e+00 : f32
      %29 = vector.broadcast %cst_18 : f32 to vector<1x128xf32>
      %30 = arith.divf %28, %29 : vector<1x128xf32>
      %31 = vector.broadcast %30 : vector<1x128xf32> to vector<8x128xf32>
      %32 = arith.subf %26, %31 : vector<8x128xf32>
      %33 = vector.broadcast %30 : vector<1x128xf32> to vector<8x128xf32>
      %34 = arith.subf %26, %33 : vector<8x128xf32>
      %35 = arith.mulf %32, %34 : vector<8x128xf32>
      %cst_19 = arith.constant dense<0.000000e+00> : vector<128xf32>
      %36 = vector.multi_reduction <add>, %35, %cst_19 [0] : vector<8x128xf32> to vector<128xf32>
      %37 = vector.shape_cast %36 : vector<128xf32> to vector<1x128xf32>
      %cst_20 = arith.constant 8.000000e+00 : f32
      %38 = vector.broadcast %cst_20 : f32 to vector<1x128xf32>
      %39 = arith.divf %37, %38 : vector<1x128xf32>
      %40 = vector.broadcast %30 : vector<1x128xf32> to vector<8x128xf32>
      %41 = arith.subf %26, %40 : vector<8x128xf32>
      %cst_21 = arith.constant 9.99999974E-6 : f32
      %42 = vector.broadcast %cst_21 : f32 to vector<1x128xf32>
      %43 = arith.addf %39, %42 : vector<1x128xf32>
      %44 = math.rsqrt %43 : vector<1x128xf32>
      %45 = vector.broadcast %44 : vector<1x128xf32> to vector<8x128xf32>
      %46 = arith.mulf %41, %45 : vector<8x128xf32>
      %c1 = arith.constant 1 : index
      %c0_22 = arith.constant 0 : index
      %47 = vector.load %arg4[%c1, %c0_22] : memref<3x128xf32, #tpu.memory_space<vmem>>, vector<1x128xf32>
      %48 = vector.broadcast %47 : vector<1x128xf32> to vector<8x128xf32>
      %49 = arith.mulf %46, %48 : vector<8x128xf32>
      %c2 = arith.constant 2 : index
      %c0_23 = arith.constant 0 : index
      %50 = vector.load %arg4[%c2, %c0_23] : memref<3x128xf32, #tpu.memory_space<vmem>>, vector<1x128xf32>
      %51 = vector.broadcast %50 : vector<1x128xf32> to vector<8x128xf32>
      %52 = arith.addf %49, %51 : vector<8x128xf32>
      %cst_24 = arith.constant 0.000000e+00 : f32
      %53 = vector.broadcast %cst_24 : f32 to vector<8x128xf32>
      %54 = arith.maximumf %52, %53 : vector<8x128xf32>
      %c0_25 = arith.constant 0 : index
      %c0_26 = arith.constant 0 : index
      %55 = vector.load %arg5[%c0_25, %c0_26] : memref<128x64xf32, #tpu.memory_space<vmem>>, vector<128x64xf32>
      %cst_27 = arith.constant dense<0.000000e+00> : vector<8x64xf32>
      %56 = tpu.matmul %54, %55, %cst_27 {dimension_numbers = #tpu.dot_dimension_numbers<[1], [0], [0], [1], [0, 0, 1, 1], [], []>} : vector<8x128xf32>, vector<128x64xf32>, vector<8x64xf32> -> vector<8x64xf32>
      %c0_28 = arith.constant 0 : index
      %c0_29 = arith.constant 0 : index
      %57 = vector.load %arg6[%c0_28, %c0_29] : memref<8x64xf32, #tpu.memory_space<vmem>>, vector<8x64xf32>
      tpu.vector_store %arg6[%c0_28, %c0_29], %56 {strides = array<i32>} : memref<8x64xf32, #tpu.memory_space<vmem>>, vector<8x64xf32>,
    } else {
    }
    return
  }
  func.func @transform_0(%arg0: i32, %arg1: i32) -> (i32, i32) {
    %c0_i32 = arith.constant 0 : i32
    return %arg1, %arg0 : i32, i32
  }
  func.func @transform_1(%arg0: i32, %arg1: i32) -> (i32, i32) {
    %c0_i32 = arith.constant 0 : i32
    %c0_i32_0 = arith.constant 0 : i32
    return %arg0, %c0_i32 : i32, i32
  }
  func.func @transform_2(%arg0: i32, %arg1: i32) -> (i32, i32) {
    %c0_i32 = arith.constant 0 : i32
    %c0_i32_0 = arith.constant 0 : i32
    %c0_i32_1 = arith.constant 0 : i32
    return %c0_i32, %c0_i32_0 : i32, i32
  }
  func.func @transform_3(%arg0: i32, %arg1: i32) -> (i32, i32) {
    %c0_i32 = arith.constant 0 : i32
    %c0_i32_0 = arith.constant 0 : i32
    %c0_i32_1 = arith.constant 0 : i32
    return %c0_i32, %c0_i32_0 : i32, i32
  }
  func.func @transform_4(%arg0: i32, %arg1: i32) -> (i32, i32) {
    %c0_i32 = arith.constant 0 : i32
    %c0_i32_0 = arith.constant 0 : i32
    %c0_i32_1 = arith.constant 0 : i32
    return %c0_i32, %c0_i32_0 : i32, i32
  }
}

</mosaic_0001>

<llo_original>
// kernel: tpu_custom_call.1
$region0: #{tpu_custom_call.1}
  #allocation0 [shape = 'u32[]', space=smem, size = 0x4, offset = 0x4, fixed_abs, tag = 'smem constant byte address 0x4 - core index']
  #allocation1 [shape = 'u32[144,128]{1,0:T(1,128)}', space=vmem, size = 0x12000, scoped, tag = 'internal scratch']
  #allocation2 [shape = 'f32[8,128]{1,0:T(8,128)}', space=vmem, size = 0x1000, scoped, tag = 'scratch operand']
  #allocation3 [shape = 'f32[4,64]{1,0:T(4,128)}', space=vmem, size = 0x800, scoped, tag = 'scratch operand']
  %s0 = inlined_call_operand.hbm [shape: f32[128,2048], index: 0, kind: input, shape index: {}]
  %s1 = inlined_call_operand.hbm [shape: f32[2048,128], index: 1, kind: input, shape index: {}]
  %s2 = inlined_call_operand.vmem [shape: f32[3,128], index: 2, kind: input, shape index: {}]
  %s3 = inlined_call_operand.vmem [shape: f32[128,64], index: 3, kind: input, shape index: {}]
  %s4 = inlined_call_operand.hbm [shape: f32[8,64], index: 4, kind: output, shape index: {}]
  %s5 = sld [smem:[#allocation0]]
  $region73: #{tpu_custom_call.1} parent=0
    _
  %s7 = ssub.s32 1, %s5
  %s8 = scalar_select 0, %s7, %s5
  $region1: #{tpu_custom_call.1} parent=0
    #allocation4 [shape = 'u8[262144]{0}', space=vmem, size = 0x40000, scoped, tag = 'input window, operand 0']
    #allocation5 [shape = 's32[2]{0}', space=sflag, size = 0x8, scoped, tag = 'scoped memory for tpu_custom_call.1']
    #allocation6 [shape = 's32[2]{0}', space=sflag, size = 0x8, scoped, tag = 'scoped memory for tpu_custom_call.1']
    #allocation7 [shape = 'u8[524288]{0}', space=vmem, size = 0x80000, scoped, tag = 'input window, operand 1']
    #allocation8 [shape = 's32[2]{0}', space=sflag, size = 0x8, scoped, tag = 'scoped memory for tpu_custom_call.1']
    #allocation9 [shape = 'u8[4096]{0}', space=vmem, size = 0x1000, scoped, tag = 'output window, operand 0, single buffered']
    %9 = vsyncpa [#allocation5], 0
    %s10 = scalar_lea.sflag [#allocation5], 1
    %11 = vsyncpa %s10, 0
    %12 = vsyncpa [#allocation8], 0
    %s13 = scalar_lea.sflag [#allocation8], 1
    %14 = vsyncpa %s13, 0
    %15 = vsyncpa [#allocation6], 0
    loop: start=0, step=1, limit=10
    $region2: #{tpu_custom_call.1} parent=1 // loop_pre_header
      _
    $region3: #{tpu_custom_call.1} parent=1 // loop_header
      %s17 = sphi 0, %s21
      %p18 = scmp.ge.s32.totalorder %s17, 10
      %s24 = sphi 0, %s36
      %s25 = sphi 0, %s32
      %s26 = sphi 0, %s24
      %s27 = sphi 0, %s25
      %s28 = sphi 0, %s26
      %s29 = sphi 0, %s27
      %s41 = sphi 0, %s43
      %s44 = sphi 0, %s41
      %s45 = sphi 0, %s44
      %s61 = sphi 0, %s45
      %s67 = sphi 0, %s69
      %s70 = sphi 0, %s67
      %s71 = sphi 0, %s70
      %s87 = sphi 0, %s71
      %s91 = sphi 0, %s91
      %s93 = sphi 0, %s91
      %s94 = sphi 0, %s93
      %s108 = sphi 0, %s94
      %s112 = sphi 0, %s112
      %s114 = sphi 0, %s112
      %s115 = sphi 0, %s114
      %s129 = sphi 0, %s115
      %s133 = sphi 0, %s133
      %s135 = sphi 0, %s133
      %s136 = sphi 0, %s135
      %s150 = sphi 0, %s136
    $region4: #{tpu_custom_call.1} parent=1 // loop_header_branch
      %20 = sbr.rel (%p18) target = $region8
    $region5: #{tpu_custom_call.1} parent=1 // loop_body
      %s22 = ssub.s32 %s17, 1
      %s23 = ssub.s32 %s17, 2
      %s30 = sadd.s32 1, %s25
      %p31 = scmp.ge.s32.totalorder %s30, 2
      %s32 = scalar_select %p31, 0, %s30
      %s33 = sadd.s32 1, %s24
      %s34 = scalar_select %p31, %s33, %s24
      %p35 = scmp.ge.s32.totalorder %s34, 4
      %s36 = scalar_select %p35, 0, %s34
      %s37 = ssub.s32 %s25, %s32
      %s38 = ssub.s32 %s24, %s36
      %s39 = sor.u32 %s37, %s38
      %p40 = scmp.eq.s32.totalorder %s39, 0
      %s42 = sadd.s32 %s41, 1
      %s43 = scalar_select %p40, %s41, %s42
      %p46 = pneg %p40
      %p47 = scmp.eq.s32.totalorder %s17, 7
      %p48 = por %p46, %p47
      %p49 = scmp.ne.s32.totalorder %s41, %s44
      %p50 = scmp.eq.s32.totalorder %s17, 0
      %p51 = por %p49, %p50
      %p52 = scmp.ne.s32.totalorder %s41, %s44
      %p53 = scmp.eq.s32.totalorder %s22, 7
      %p54 = por %p52, %p53
      %p55 = scmp.ne.s32.totalorder %s44, %s45
      %p56 = scmp.eq.s32.totalorder %s22, 0
      %p57 = por %p55, %p56
      %p58 = scmp.ne.s32.totalorder %s44, %s45
      %p59 = scmp.eq.s32.totalorder %s23, 7
      %p60 = por %p58, %p59
      %p62 = scmp.ne.s32.totalorder %s45, %s61
      %p63 = scmp.eq.s32.totalorder %s23, 0
      %p64 = por %p62, %p63
      %s65 = ssub.s32 %s24, %s36
      %p66 = scmp.eq.s32.totalorder %s65, 0
      %s68 = sadd.s32 %s67, 1
      %s69 = scalar_select %p66, %s67, %s68
      %p72 = pneg %p66
      %p73 = scmp.eq.s32.totalorder %s17, 7
      %p74 = por %p72, %p73
      %p75 = scmp.ne.s32.totalorder %s67, %s70
      %p76 = scmp.eq.s32.totalorder %s17, 0
      %p77 = por %p75, %p76
      %p78 = scmp.ne.s32.totalorder %s67, %s70
      %p79 = scmp.eq.s32.totalorder %s22, 7
      %p80 = por %p78, %p79
      %p81 = scmp.ne.s32.totalorder %s70, %s71
      %p82 = scmp.eq.s32.totalorder %s22, 0
      %p83 = por %p81, %p82
      %p84 = scmp.ne.s32.totalorder %s70, %s71
      %p85 = scmp.eq.s32.totalorder %s23, 7
      %p86 = por %p84, %p85
      %p88 = scmp.ne.s32.totalorder %s71, %s87
      %p89 = scmp.eq.s32.totalorder %s23, 0
      %p90 = por %p88, %p89
      %s92 = sadd.s32 %s91, 1
      %p95 = scmp.eq.s32.totalorder %s17, 7
      %p96 = scmp.ne.s32.totalorder %s91, %s93
      %p97 = scmp.eq.s32.totalorder %s17, 0
      %p98 = por %p96, %p97
      %p99 = scmp.ne.s32.totalorder %s91, %s93
      %p100 = scmp.eq.s32.totalorder %s22, 7
      %p101 = por %p99, %p100
      %p102 = scmp.ne.s32.totalorder %s93, %s94
      %p103 = scmp.eq.s32.totalorder %s22, 0
      %p104 = por %p102, %p103
      %p105 = scmp.ne.s32.totalorder %s93, %s94
      %p106 = scmp.eq.s32.totalorder %s23, 7
      %p107 = por %p105, %p106
      %p109 = scmp.ne.s32.totalorder %s94, %s108
      %p110 = scmp.eq.s32.totalorder %s23, 0
      %p111 = por %p109, %p110
      %s113 = sadd.s32 %s112, 1
      %p116 = scmp.eq.s32.totalorder %s17, 7
      %p117 = scmp.ne.s32.totalorder %s112, %s114
      %p118 = scmp.eq.s32.totalorder %s17, 0
      %p119 = por %p117, %p118
      %p120 = scmp.ne.s32.totalorder %s112, %s114
      %p121 = scmp.eq.s32.totalorder %s22, 7
      %p122 = por %p120, %p121
      %p123 = scmp.ne.s32.totalorder %s114, %s115
      %p124 = scmp.eq.s32.totalorder %s22, 0
      %p125 = por %p123, %p124
      %p126 = scmp.ne.s32.totalorder %s114, %s115
      %p127 = scmp.eq.s32.totalorder %s23, 7
      %p128 = por %p126, %p127
      %p130 = scmp.ne.s32.totalorder %s115, %s129
      %p131 = scmp.eq.s32.totalorder %s23, 0
      %p132 = por %p130, %p131
      %s134 = sadd.s32 %s133, 1
      %p137 = scmp.eq.s32.totalorder %s17, 7
      %p138 = scmp.ne.s32.totalorder %s133, %s135
      %p139 = scmp.eq.s32.totalorder %s17, 0
      %p140 = por %p138, %p139
      %p141 = scmp.ne.s32.totalorder %s133, %s135
      %p142 = scmp.eq.s32.totalorder %s22, 7
      %p143 = por %p141, %p142
      %p144 = scmp.ne.s32.totalorder %s135, %s136
      %p145 = scmp.eq.s32.totalorder %s22, 0
      %p146 = por %p144, %p145
      %p147 = scmp.ne.s32.totalorder %s135, %s136
      %p148 = scmp.eq.s32.totalorder %s23, 7
      %p149 = por %p147, %p148
      %p151 = scmp.ne.s32.totalorder %s136, %s150
      %p152 = scmp.eq.s32.totalorder %s23, 0
      %p153 = por %p151, %p152
      %p154 = scmp.le.s32.totalorder 1, %s17
      %p155 = scmp.lt.s32.totalorder %s17, 9
      %p156 = pnand %p154, %p155
      %p157 = pneg %p156
      // Predicated region
      $region9: #{tpu_custom_call.1} parent=5 // pred_check
        _
      $region10: #{tpu_custom_call.1} parent=5 // pred_check_branch
        %159 = sbr.rel (%p156) target = $region12
      $region11: #{tpu_custom_call.1} parent=5 // pred_region
        %s160 = ssub.s32 %s17, 1
        // Predicated region
        $region13: #{tpu_custom_call.1} parent=11 // pred_check
          %p161 = pneg %p104
        $region14: #{tpu_custom_call.1} parent=11 // pred_check_branch
          %163 = sbr.rel (%p161) target = $region16
        $region15: #{tpu_custom_call.1} parent=11 // pred_region
          _
        $region16: #{tpu_custom_call.1} parent=11 // pred_fallthru
          _
        // Predicated region
        $region17: #{tpu_custom_call.1} parent=11 // pred_check
          %p164 = pneg %p125
        $region18: #{tpu_custom_call.1} parent=11 // pred_check_branch
          %166 = sbr.rel (%p164) target = $region20
        $region19: #{tpu_custom_call.1} parent=11 // pred_region
          _
        $region20: #{tpu_custom_call.1} parent=11 // pred_fallthru
          _
      $region12: #{tpu_custom_call.1} parent=5 // pred_fallthru
        _
      %p167 = scmp.lt.s32.totalorder %s17, 8
      // Predicated region
      $region21: #{tpu_custom_call.1} parent=5 // pred_check
        %p168 = pneg %p167
      $region22: #{tpu_custom_call.1} parent=5 // pred_check_branch
        %170 = sbr.rel (%p168) target = $region24
      $region23: #{tpu_custom_call.1} parent=5 // pred_region
        // Predicated region
        $region25: #{tpu_custom_call.1} parent=23 // pred_check
          %p171 = pneg %p51
        $region26: #{tpu_custom_call.1} parent=23 // pred_check_branch
          %173 = sbr.rel (%p171) target = $region28
        $region27: #{tpu_custom_call.1} parent=23 // pred_region
          %s174 = sand.u32 %s41, 1
          %s175 = scalar_lea.sflag [#allocation5], %s174
          %s176 = sand.u32 %s41, 1
          %s177 = smul.addr %s176, 256
          %s178 = scalar_lea.vmem [#allocation4], %s177
          %s179 = smul.u32 8, %s25
          %s180 = smul.u32 4, %s24
          %s182 = ssub.s32 4096, 4096
          %183 = vsyncadd %s175, %s182
          %s184 = smul.addr %s179, 16
          %s185 = sadd.s32 %s180, %s184
          %s186 = smul.addr %s185, 128
          %s187 = scalar_lea.hbm %s0, %s186
          %s188 = sshll.u32 %s178, 4
          %s189 = int_to_ptr.vmem [resolvable:$true] %s188
          %194 = dma.hbm_to_vmem [thread:$0]  %s187, 4096, %s189, %s175, 2048, 512, 32
        $region28: #{tpu_custom_call.1} parent=23 // pred_fallthru
          _
        // Predicated region
        $region29: #{tpu_custom_call.1} parent=23 // pred_check
          %p195 = pneg %p77
        $region30: #{tpu_custom_call.1} parent=23 // pred_check_branch
          %197 = sbr.rel (%p195) target = $region32
        $region31: #{tpu_custom_call.1} parent=23 // pred_region
          %s198 = sand.u32 %s67, 1
          %s199 = scalar_lea.sflag [#allocation8], %s198
          %s200 = sand.u32 %s67, 1
          %s201 = smul.addr %s200, 512
          %s202 = scalar_lea.vmem [#allocation7], %s201
          %s203 = smul.u32 64, %s24
          %s205 = ssub.s32 8192, 8192
          %206 = vsyncadd %s199, %s205
          %s207 = smul.addr %s203, 128
          %s208 = scalar_lea.hbm %s1, %s207
          %s209 = sshll.u32 %s202, 4
          %s210 = int_to_ptr.vmem [resolvable:$true] %s209
          %215 = dma.hbm_to_vmem [thread:$0]  %s208, 8192, %s210, %s199, 128, 128, 8
        $region32: #{tpu_custom_call.1} parent=23 // pred_fallthru
          _
      $region24: #{tpu_custom_call.1} parent=5 // pred_fallthru
        _
      %p216 = scmp.le.s32.totalorder 1, %s17
      %p217 = scmp.lt.s32.totalorder %s17, 9
      %p218 = pnand %p216, %p217
      %p219 = pneg %p218
      // Predicated region
      $region33: #{tpu_custom_call.1} parent=5 // pred_check
        _
      $region34: #{tpu_custom_call.1} parent=5 // pred_check_branch
        %221 = sbr.rel (%p218) target = $region36
      $region35: #{tpu_custom_call.1} parent=5 // pred_region
        %s222 = ssub.s32 %s17, 1
        %s223 = sand.u32 %s44, 1
        %s224 = scalar_lea.sflag [#allocation5], %s223
        %s225 = sand.u32 %s44, 1
        %s226 = smul.addr %s225, 256
        %s227 = scalar_lea.vmem [#allocation4], %s226
        // Predicated region
        $region37: #{tpu_custom_call.1} parent=35 // pred_check
          %p228 = pneg %p57
        $region38: #{tpu_custom_call.1} parent=35 // pred_check_branch
          %230 = sbr.rel (%p228) target = $region40
        $region39: #{tpu_custom_call.1} parent=35 // pred_region
          %231 = dma.done %s224, 4096
        $region40: #{tpu_custom_call.1} parent=35 // pred_fallthru
          _
        %s232 = sand.u32 %s70, 1
        %s233 = scalar_lea.sflag [#allocation8], %s232
        %s234 = sand.u32 %s70, 1
        %s235 = smul.addr %s234, 512
        %s236 = scalar_lea.vmem [#allocation7], %s235
        // Predicated region
        $region41: #{tpu_custom_call.1} parent=35 // pred_check
          %p237 = pneg %p83
        $region42: #{tpu_custom_call.1} parent=35 // pred_check_branch
          %239 = sbr.rel (%p237) target = $region44
        $region43: #{tpu_custom_call.1} parent=35 // pred_region
          %240 = dma.done %s233, 8192
        $region44: #{tpu_custom_call.1} parent=35 // pred_fallthru
          _
        %s241 = sand.u32 %s44, 1
        %s242 = scalar_lea.sflag [#allocation5], %s241
        %s243 = sand.u32 %s44, 1
        %s244 = smul.addr %s243, 256
        %s245 = scalar_lea.vmem [#allocation4], %s244
        %p246 = pneg %p57
        %p247 = pneg %p54
        %s248 = sand.u32 %s70, 1
        %s249 = scalar_lea.sflag [#allocation8], %s248
        %s250 = sand.u32 %s70, 1
        %s251 = smul.addr %s250, 512
        %s252 = scalar_lea.vmem [#allocation7], %s251
        %p253 = pneg %p83
        %p254 = pneg %p80
        %p255 = pneg %p104
        %p256 = pneg %p101
        %p257 = pneg %p125
        %p258 = pneg %p122
        %p259 = pneg %p146
        %p260 = pneg %p143
        %s261 = smul.u32 8, %s27
        %s262 = smul.u32 4, %s26
        %s263 = smul.u32 64, %s26
        %p264 = scmp.eq.s32.totalorder %s26, 0
        %p265 = scmp.eq.s32.totalorder %s27, 0
        %p266 = pnand %p264, %p265
        %p267 = pneg %p266
        // Predicated region
        $region45: #{tpu_custom_call.1} parent=35 // pred_check
          _
        $region46: #{tpu_custom_call.1} parent=35 // pred_check_branch
          %269 = sbr.rel (%p266) target = $region48
        $region47: #{tpu_custom_call.1} parent=35 // pred_region
          %v270 = vlaneseq
          %v271 = vand.u32 %v270, 127
          %v272 = vlaneseq
          %v273 = vshrl.u32 %v272, 7
          %v274 = vmul.u32 %v273, 16
          %vm275 = vcmp.ge.s32.totalorder %v271, %v274
          %v276 = vadd.s32 %v273, 1
          %v277 = vmul.u32 %v276, 16
          %vm278 = vcmp.lt.s32.totalorder %v271, %v277
          %vm279 = vmand %vm275, %vm278
          %v280 = vsel %vm279, 0.0625, 0.0
          %vm281 = vcmask 519168
          %282 = vst.msk [vmem:[#allocation3] sm:$0xf] %vm281, %v280
        $region48: #{tpu_custom_call.1} parent=35 // pred_fallthru
          _
        %v283 = vld [vmem:[#allocation3] sm:$0xf]
        %v284 = vld [vmem:[%s227] sm:$0xff]
        %v285 = vld [vmem:[%s227 + $0x8] sm:$0xff]
        %v286 = vld [vmem:[%s227 + $0x10] sm:$0xff]
        %v287 = vld [vmem:[%s227 + $0x18] sm:$0xff]
        %v288 = vld [vmem:[%s227 + $0x20] sm:$0xff]
        %v289 = vld [vmem:[%s227 + $0x28] sm:$0xff]
        %v290 = vld [vmem:[%s227 + $0x30] sm:$0xff]
        %v291 = vld [vmem:[%s227 + $0x38] sm:$0xff]
        %v292 = vld [vmem:[%s227 + $0x40] sm:$0xff]
        %v293 = vld [vmem:[%s227 + $0x48] sm:$0xff]
        %v294 = vld [vmem:[%s227 + $0x50] sm:$0xff]
        %v295 = vld [vmem:[%s227 + $0x58] sm:$0xff]
        %v296 = vld [vmem:[%s227 + $0x60] sm:$0xff]
        %v297 = vld [vmem:[%s227 + $0x68] sm:$0xff]
        %v298 = vld [vmem:[%s227 + $0x70] sm:$0xff]
        %v299 = vld [vmem:[%s227 + $0x78] sm:$0xff]
        %v300 = vld [vmem:[%s227 + $0x80] sm:$0xff]
        %v301 = vld [vmem:[%s227 + $0x88] sm:$0xff]
        %v302 = vld [vmem:[%s227 + $0x90] sm:$0xff]
        %v303 = vld [vmem:[%s227 + $0x98] sm:$0xff]
        %v304 = vld [vmem:[%s227 + $0xa0] sm:$0xff]
        %v305 = vld [vmem:[%s227 + $0xa8] sm:$0xff]
        %v306 = vld [vmem:[%s227 + $0xb0] sm:$0xff]
        %v307 = vld [vmem:[%s227 + $0xb8] sm:$0xff]
        %v308 = vld [vmem:[%s227 + $0xc0] sm:$0xff]
        %v309 = vld [vmem:[%s227 + $0xc8] sm:$0xff]
        %v310 = vld [vmem:[%s227 + $0xd0] sm:$0xff]
        %v311 = vld [vmem:[%s227 + $0xd8] sm:$0xff]
        %v312 = vld [vmem:[%s227 + $0xe0] sm:$0xff]
        %v313 = vld [vmem:[%s227 + $0xe8] sm:$0xff]
        %v314 = vld [vmem:[%s227 + $0xf0] sm:$0xff]
        %v315 = vld [vmem:[%s227 + $0xf8] sm:$0xff]
        %vm316 = vcmask 523264
        %v318 = vsel %vm316, %v283, 0
        %320 = vmatprep.subr.mxu0 %v285
        %321 = vmatpush1.msra.mxu0 %v284
        %322 = vmatprep.subr.mxu0 %v289
        %323 = vmatpush1.msra.mxu0 %v288
        %324 = vmatprep.subr.mxu0 %v293
        %325 = vmatpush1.msra.mxu0 %v292
        %326 = vmatprep.subr.mxu0 %v297
        %327 = vmatpush1.msra.mxu0 %v296
        %328 = vmatprep.subr.mxu0 %v301
        %329 = vmatpush1.msra.mxu0 %v300
        %330 = vmatprep.subr.mxu0 %v305
        %331 = vmatpush1.msra.mxu0 %v304
        %332 = vmatprep.subr.mxu0 %v309
        %333 = vmatpush1.msra.mxu0 %v308
        %334 = vmatprep.subr.mxu0 %v313
        %335 = vmatpush1.msra.mxu0 %v312
        %336 = vmatprep.subr.mxu0 0.0
        %337 = vmatpush1.msra.mxu0 0.0
        %338 = vmatprep.subr.mxu0 0.0
        %339 = vmatpush1.msra.mxu0 0.0
        %340 = vmatprep.subr.mxu0 0.0
        %341 = vmatpush1.msra.mxu0 0.0
        %342 = vmatprep.subr.mxu0 0.0
        %343 = vmatpush1.msra.mxu0 0.0
        %344 = vmatprep.subr.mxu0 0.0
        %345 = vmatpush1.msra.mxu0 0.0
        %346 = vmatprep.subr.mxu0 0.0
        %347 = vmatpush1.msra.mxu0 0.0
        %348 = vmatprep.subr.mxu0 0.0
        %349 = vmatpush1.msra.mxu0 0.0
        %350 = vmatprep.subr.mxu0 0.0
        %351 = vmatpush1.msra.mxu0 0.0
        %352 = vmatprep.subr.mxu0 0.0
        %353 = vmatpush1.msra.mxu0 0.0
        %354 = vmatprep.subr.mxu0 0.0
        %355 = vmatpush1.msra.mxu0 0.0
        %356 = vmatprep.subr.mxu0 0.0
        %357 = vmatpush1.msra.mxu0 0.0
        %358 = vmatprep.subr.mxu0 0.0
        %359 = vmatpush1.msra.mxu0 0.0
        %360 = vmatprep.subr.mxu0 0.0
        %361 = vmatpush1.msra.mxu0 0.0
        %362 = vmatprep.subr.mxu0 0.0
        %363 = vmatpush1.msra.mxu0 0.0
        %364 = vmatprep.subr.mxu0 0.0
        %365 = vmatpush1.msra.mxu0 0.0
        %366 = vmatprep.subr.mxu0 0.0
        %367 = vmatpush1.msra.mxu0 0.0
        %368 = vmatprep.subr.mxu0 0.0
        %369 = vmatpush1.msra.mxu0 0.0
        %370 = vmatprep.subr.mxu0 0.0
        %371 = vmatpush1.msra.mxu0 0.0
        %372 = vmatprep.subr.mxu0 0.0
        %373 = vmatpush1.msra.mxu0 0.0
        %374 = vmatprep.subr.mxu0 0.0
        %375 = vmatpush1.msra.mxu0 0.0
        %376 = vmatprep.subr.mxu0 0.0
        %377 = vmatpush1.msra.mxu0 0.0
        %378 = vmatprep.subr.mxu0 0.0
        %379 = vmatpush1.msra.mxu0 0.0
        %380 = vmatprep.subr.mxu0 0.0
        %381 = vmatpush1.msra.mxu0 0.0
        %382 = vmatprep.subr.mxu0 0.0
        %383 = vmatpush1.msra.mxu0 0.0
        %384 = vmatprep.mubr.f32.mxu0 0.0
        %385 = vmatmul.mubr.f32.gmra.mrb[0].mxu0 %v318
        %v386 = vpop.f32.mrb[0].mxu0
        %v387 = vadd.f32 0.0, %v386
        %v388 = vpop.f32.mrb[0].mxu0
        %v389 = vadd.f32 0.0, %v388
        %390 = vdwg.mxu0
        %391 = vmatprep.subr.mxu0 %v287
        %392 = vmatpush1.msra.mxu0 %v286
        %393 = vmatprep.subr.mxu0 %v291
        %394 = vmatpush1.msra.mxu0 %v290
        %395 = vmatprep.subr.mxu0 %v295
        %396 = vmatpush1.msra.mxu0 %v294
        %397 = vmatprep.subr.mxu0 %v299
        %398 = vmatpush1.msra.mxu0 %v298
        %399 = vmatprep.subr.mxu0 %v303
        %400 = vmatpush1.msra.mxu0 %v302
        %401 = vmatprep.subr.mxu0 %v307
        %402 = vmatpush1.msra.mxu0 %v306
        %403 = vmatprep.subr.mxu0 %v311
        %404 = vmatpush1.msra.mxu0 %v310
        %405 = vmatprep.subr.mxu0 %v315
        %406 = vmatpush1.msra.mxu0 %v314
        %407 = vmatprep.subr.mxu0 0.0
        %408 = vmatpush1.msra.mxu0 0.0
        %409 = vmatprep.subr.mxu0 0.0
        %410 = vmatpush1.msra.mxu0 0.0
        %411 = vmatprep.subr.mxu0 0.0
        %412 = vmatpush1.msra.mxu0 0.0
        %413 = vmatprep.subr.mxu0 0.0
        %414 = vmatpush1.msra.mxu0 0.0
        %415 = vmatprep.subr.mxu0 0.0
        %416 = vmatpush1.msra.mxu0 0.0
        %417 = vmatprep.subr.mxu0 0.0
        %418 = vmatpush1.msra.mxu0 0.0
        %419 = vmatprep.subr.mxu0 0.0
        %420 = vmatpush1.msra.mxu0 0.0
        %421 = vmatprep.subr.mxu0 0.0
        %422 = vmatpush1.msra.mxu0 0.0
        %423 = vmatprep.subr.mxu0 0.0
        %424 = vmatpush1.msra.mxu0 0.0
        %425 = vmatprep.subr.mxu0 0.0
        %426 = vmatpush1.msra.mxu0 0.0
        %427 = vmatprep.subr.mxu0 0.0
        %428 = vmatpush1.msra.mxu0 0.0
        %429 = vmatprep.subr.mxu0 0.0
        %430 = vmatpush1.msra.mxu0 0.0
        %431 = vmatprep.subr.mxu0 0.0
        %432 = vmatpush1.msra.mxu0 0.0
        %433 = vmatprep.subr.mxu0 0.0
        %434 = vmatpush1.msra.mxu0 0.0
        %435 = vmatprep.subr.mxu0 0.0
        %436 = vmatpush1.msra.mxu0 0.0
        %437 = vmatprep.subr.mxu0 0.0
        %438 = vmatpush1.msra.mxu0 0.0
        %439 = vmatprep.subr.mxu0 0.0
        %440 = vmatpush1.msra.mxu0 0.0
        %441 = vmatprep.subr.mxu0 0.0
        %442 = vmatpush1.msra.mxu0 0.0
        %443 = vmatprep.subr.mxu0 0.0
        %444 = vmatpush1.msra.mxu0 0.0
        %445 = vmatprep.subr.mxu0 0.0
        %446 = vmatpush1.msra.mxu0 0.0
        %447 = vmatprep.subr.mxu0 0.0
        %448 = vmatpush1.msra.mxu0 0.0
        %449 = vmatprep.subr.mxu0 0.0
        %450 = vmatpush1.msra.mxu0 0.0
        %451 = vmatprep.subr.mxu0 0.0
        %452 = vmatpush1.msra.mxu0 0.0
        %453 = vmatprep.subr.mxu0 0.0
        %454 = vmatpush1.msra.mxu0 0.0
        %455 = vmatprep.mubr.f32.mxu0 0.0
        %456 = vmatmul.mubr.f32.gmra.mrb[0].mxu0 %v318
        %v457 = vpop.f32.mrb[0].mxu0
        %v458 = vadd.f32 0.0, %v457
        %v459 = vpop.f32.mrb[0].mxu0
        %v460 = vadd.f32 0.0, %v459
        %461 = vdwg.mxu0
        %v462 = vld [vmem:[%s236] sm:$0xff]
        %v463 = vld [vmem:[%s236 + $0x8] sm:$0xff]
        %v464 = vld [vmem:[%s236 + $0x10] sm:$0xff]
        %v465 = vld [vmem:[%s236 + $0x18] sm:$0xff]
        %v466 = vld [vmem:[%s236 + $0x20] sm:$0xff]
        %v467 = vld [vmem:[%s236 + $0x28] sm:$0xff]
        %v468 = vld [vmem:[%s236 + $0x30] sm:$0xff]
        %v469 = vld [vmem:[%s236 + $0x38] sm:$0xff]
        %v470 = vld [vmem:[%s236 + $0x40] sm:$0xff]
        %v471 = vld [vmem:[%s236 + $0x48] sm:$0xff]
        %v472 = vld [vmem:[%s236 + $0x50] sm:$0xff]
        %v473 = vld [vmem:[%s236 + $0x58] sm:$0xff]
        %v474 = vld [vmem:[%s236 + $0x60] sm:$0xff]
        %v475 = vld [vmem:[%s236 + $0x68] sm:$0xff]
        %v476 = vld [vmem:[%s236 + $0x70] sm:$0xff]
        %v477 = vld [vmem:[%s236 + $0x78] sm:$0xff]
        %v478 = vld [vmem:[%s236 + $0x80] sm:$0xff]
        %v479 = vld [vmem:[%s236 + $0x88] sm:$0xff]
        %v480 = vld [vmem:[%s236 + $0x90] sm:$0xff]
        %v481 = vld [vmem:[%s236 + $0x98] sm:$0xff]
        %v482 = vld [vmem:[%s236 + $0xa0] sm:$0xff]
        %v483 = vld [vmem:[%s236 + $0xa8] sm:$0xff]
        %v484 = vld [vmem:[%s236 + $0xb0] sm:$0xff]
        %v485 = vld [vmem:[%s236 + $0xb8] sm:$0xff]
        %v486 = vld [vmem:[%s236 + $0xc0] sm:$0xff]
        %v487 = vld [vmem:[%s236 + $0xc8] sm:$0xff]
        %v488 = vld [vmem:[%s236 + $0xd0] sm:$0xff]
        %v489 = vld [vmem:[%s236 + $0xd8] sm:$0xff]
        %v490 = vld [vmem:[%s236 + $0xe0] sm:$0xff]
        %v491 = vld [vmem:[%s236 + $0xe8] sm:$0xff]
        %v492 = vld [vmem:[%s236 + $0xf0] sm:$0xff]
        %v493 = vld [vmem:[%s236 + $0xf8] sm:$0xff]
        %v494 = vld [vmem:[%s236 + $0x100] sm:$0xff]
        %v495 = vld [vmem:[%s236 + $0x108] sm:$0xff]
        %v496 = vld [vmem:[%s236 + $0x110] sm:$0xff]
        %v497 = vld [vmem:[%s236 + $0x118] sm:$0xff]
        %v498 = vld [vmem:[%s236 + $0x120] sm:$0xff]
        %v499 = vld [vmem:[%s236 + $0x128] sm:$0xff]
        %v500 = vld [vmem:[%s236 + $0x130] sm:$0xff]
        %v501 = vld [vmem:[%s236 + $0x138] sm:$0xff]
        %v502 = vld [vmem:[%s236 + $0x140] sm:$0xff]
        %v503 = vld [vmem:[%s236 + $0x148] sm:$0xff]
        %v504 = vld [vmem:[%s236 + $0x150] sm:$0xff]
        %v505 = vld [vmem:[%s236 + $0x158] sm:$0xff]
        %v506 = vld [vmem:[%s236 + $0x160] sm:$0xff]
        %v507 = vld [vmem:[%s236 + $0x168] sm:$0xff]
        %v508 = vld [vmem:[%s236 + $0x170] sm:$0xff]
        %v509 = vld [vmem:[%s236 + $0x178] sm:$0xff]
        %v510 = vld [vmem:[%s236 + $0x180] sm:$0xff]
        %v511 = vld [vmem:[%s236 + $0x188] sm:$0xff]
        %v512 = vld [vmem:[%s236 + $0x190] sm:$0xff]
        %v513 = vld [vmem:[%s236 + $0x198] sm:$0xff]
        %v514 = vld [vmem:[%s236 + $0x1a0] sm:$0xff]
        %v515 = vld [vmem:[%s236 + $0x1a8] sm:$0xff]
        %v516 = vld [vmem:[%s236 + $0x1b0] sm:$0xff]
        %v517 = vld [vmem:[%s236 + $0x1b8] sm:$0xff]
        %v518 = vld [vmem:[%s236 + $0x1c0] sm:$0xff]
        %v519 = vld [vmem:[%s236 + $0x1c8] sm:$0xff]
        %v520 = vld [vmem:[%s236 + $0x1d0] sm:$0xff]
        %v521 = vld [vmem:[%s236 + $0x1d8] sm:$0xff]
        %v522 = vld [vmem:[%s236 + $0x1e0] sm:$0xff]
        %v523 = vld [vmem:[%s236 + $0x1e8] sm:$0xff]
        %v524 = vld [vmem:[%s236 + $0x1f0] sm:$0xff]
        %v525 = vld [vmem:[%s236 + $0x1f8] sm:$0xff]
        %526 = vmatprep.subr.mxu0 0.0
        %527 = vmatpush1.msra.mxu0 %v462
        %528 = vmatprep.subr.mxu0 0.0
        %529 = vmatpush1.msra.mxu0 %v463
        %530 = vmatprep.subr.mxu0 0.0
        %531 = vmatpush1.msra.mxu0 %v464
        %532 = vmatprep.subr.mxu0 0.0
        %533 = vmatpush1.msra.mxu0 %v465
        %534 = vmatprep.subr.mxu0 0.0
        %535 = vmatpush1.msra.mxu0 %v466
        %536 = vmatprep.subr.mxu0 0.0
        %537 = vmatpush1.msra.mxu0 %v467
        %538 = vmatprep.subr.mxu0 0.0
        %539 = vmatpush1.msra.mxu0 %v468
        %540 = vmatprep.subr.mxu0 0.0
        %541 = vmatpush1.msra.mxu0 %v469
        %542 = vmatprep.subr.mxu0 0.0
        %543 = vmatpush1.msra.mxu0 %v470
        %544 = vmatprep.subr.mxu0 0.0
        %545 = vmatpush1.msra.mxu0 %v471
        %546 = vmatprep.subr.mxu0 0.0
        %547 = vmatpush1.msra.mxu0 %v472
        %548 = vmatprep.subr.mxu0 0.0
        %549 = vmatpush1.msra.mxu0 %v473
        %550 = vmatprep.subr.mxu0 0.0
        %551 = vmatpush1.msra.mxu0 %v474
        %552 = vmatprep.subr.mxu0 0.0
        %553 = vmatpush1.msra.mxu0 %v475
        %554 = vmatprep.subr.mxu0 0.0
        %555 = vmatpush1.msra.mxu0 %v476
        %556 = vmatprep.subr.mxu0 0.0
        %557 = vmatpush1.msra.mxu0 %v477
        %558 = vmatprep.subr.mxu0 0.0
        %559 = vmatpush1.msra.mxu0 %v478
        %560 = vmatprep.subr.mxu0 0.0
        %561 = vmatpush1.msra.mxu0 %v479
        %562 = vmatprep.subr.mxu0 0.0
        %563 = vmatpush1.msra.mxu0 %v480
        %564 = vmatprep.subr.mxu0 0.0
        %565 = vmatpush1.msra.mxu0 %v481
        %566 = vmatprep.subr.mxu0 0.0
        %567 = vmatpush1.msra.mxu0 %v482
        %568 = vmatprep.subr.mxu0 0.0
        %569 = vmatpush1.msra.mxu0 %v483
        %570 = vmatprep.subr.mxu0 0.0
        %571 = vmatpush1.msra.mxu0 %v484
        %572 = vmatprep.subr.mxu0 0.0
        %573 = vmatpush1.msra.mxu0 %v485
        %574 = vmatprep.subr.mxu0 0.0
        %575 = vmatpush1.msra.mxu0 %v486
        %576 = vmatprep.subr.mxu0 0.0
        %577 = vmatpush1.msra.mxu0 %v487
        %578 = vmatprep.subr.mxu0 0.0
        %579 = vmatpush1.msra.mxu0 %v488
        %580 = vmatprep.subr.mxu0 0.0
        %581 = vmatpush1.msra.mxu0 %v489
        %582 = vmatprep.subr.mxu0 0.0
        %583 = vmatpush1.msra.mxu0 %v490
        %584 = vmatprep.subr.mxu0 0.0
        %585 = vmatpush1.msra.mxu0 %v491
        %586 = vmatprep.subr.mxu0 0.0
        %587 = vmatpush1.msra.mxu0 %v492
        %588 = vmatprep.subr.mxu0 0.0
        %589 = vmatpush1.msra.mxu0 %v493
        %590 = vmatprep.mubr.f32.mxu0 %v389
        %591 = vmatmul.mubr.f32.gmra.mrb[0].mxu0 %v387
        %v592 = vpop.f32.mrb[0].mxu0
        %v593 = vadd.f32 0.0, %v592
        %v594 = vpop.f32.mrb[0].mxu0
        %595 = vdwg.mxu0
        %596 = vmatprep.subr.mxu0 0.0
        %597 = vmatpush1.msra.mxu0 %v494
        %598 = vmatprep.subr.mxu0 0.0
        %599 = vmatpush1.msra.mxu0 %v495
        %600 = vmatprep.subr.mxu0 0.0
        %601 = vmatpush1.msra.mxu0 %v496
        %602 = vmatprep.subr.mxu0 0.0
        %603 = vmatpush1.msra.mxu0 %v497
        %604 = vmatprep.subr.mxu0 0.0
        %605 = vmatpush1.msra.mxu0 %v498
        %606 = vmatprep.subr.mxu0 0.0
        %607 = vmatpush1.msra.mxu0 %v499
        %608 = vmatprep.subr.mxu0 0.0
        %609 = vmatpush1.msra.mxu0 %v500
        %610 = vmatprep.subr.mxu0 0.0
        %611 = vmatpush1.msra.mxu0 %v501
        %612 = vmatprep.subr.mxu0 0.0
        %613 = vmatpush1.msra.mxu0 %v502
        %614 = vmatprep.subr.mxu0 0.0
        %615 = vmatpush1.msra.mxu0 %v503
        %616 = vmatprep.subr.mxu0 0.0
        %617 = vmatpush1.msra.mxu0 %v504
        %618 = vmatprep.subr.mxu0 0.0
        %619 = vmatpush1.msra.mxu0 %v505
        %620 = vmatprep.subr.mxu0 0.0
        %621 = vmatpush1.msra.mxu0 %v506
        %622 = vmatprep.subr.mxu0 0.0
        %623 = vmatpush1.msra.mxu0 %v507
        %624 = vmatprep.subr.mxu0 0.0
        %625 = vmatpush1.msra.mxu0 %v508
        %626 = vmatprep.subr.mxu0 0.0
        %627 = vmatpush1.msra.mxu0 %v509
        %628 = vmatprep.subr.mxu0 0.0
        %629 = vmatpush1.msra.mxu0 %v510
        %630 = vmatprep.subr.mxu0 0.0
        %631 = vmatpush1.msra.mxu0 %v511
        %632 = vmatprep.subr.mxu0 0.0
        %633 = vmatpush1.msra.mxu0 %v512
        %634 = vmatprep.subr.mxu0 0.0
        %635 = vmatpush1.msra.mxu0 %v513
        %636 = vmatprep.subr.mxu0 0.0
        %637 = vmatpush1.msra.mxu0 %v514
        %638 = vmatprep.subr.mxu0 0.0
        %639 = vmatpush1.msra.mxu0 %v515
        %640 = vmatprep.subr.mxu0 0.0
        %641 = vmatpush1.msra.mxu0 %v516
        %642 = vmatprep.subr.mxu0 0.0
        %643 = vmatpush1.msra.mxu0 %v517
        %644 = vmatprep.subr.mxu0 0.0
        %645 = vmatpush1.msra.mxu0 %v518
        %646 = vmatprep.subr.mxu0 0.0
        %647 = vmatpush1.msra.mxu0 %v519
        %648 = vmatprep.subr.mxu0 0.0
        %649 = vmatpush1.msra.mxu0 %v520
        %650 = vmatprep.subr.mxu0 0.0
        %651 = vmatpush1.msra.mxu0 %v521
        %652 = vmatprep.subr.mxu0 0.0
        %653 = vmatpush1.msra.mxu0 %v522
        %654 = vmatprep.subr.mxu0 0.0
        %655 = vmatpush1.msra.mxu0 %v523
        %656 = vmatprep.subr.mxu0 0.0
        %657 = vmatpush1.msra.mxu0 %v524
        %658 = vmatprep.subr.mxu0 0.0
        %659 = vmatpush1.msra.mxu0 %v525
        %660 = vmatprep.mubr.f32.mxu0 %v460
        %661 = vmatmul.mubr.f32.gmra.mrb[0].mxu0 %v458
        %v662 = vpop.f32.mrb[0].mxu0
        %v663 = vadd.f32 %v593, %v662
        %v664 = vpop.f32.mrb[0].mxu0
        %665 = vdwg.mxu0
        %s666 = smul.u32 %s27, 4
        // Predicated region
        $region49: #{tpu_custom_call.1} parent=35 // pred_check
          %p667 = pneg %p264
        $region50: #{tpu_custom_call.1} parent=35 // pred_check_branch
          %669 = sbr.rel (%p667) target = $region52
        $region51: #{tpu_custom_call.1} parent=35 // pred_region
          %s670 = scalar_lea.vmem [#allocation2], %s666
          %671 = vst [vmem:[%s670] sm:$0xf] %v663
        $region52: #{tpu_custom_call.1} parent=35 // pred_fallthru
          _
        %p672 = scmp.ne.s32.totalorder %s26, 0
        // Predicated region
        $region53: #{tpu_custom_call.1} parent=35 // pred_check
          %p673 = pneg %p672
        $region54: #{tpu_custom_call.1} parent=35 // pred_check_branch
          %675 = sbr.rel (%p673) target = $region56
        $region55: #{tpu_custom_call.1} parent=35 // pred_region
          %s676 = scalar_lea.vmem [#allocation2], %s666
          %v677 = vld [vmem:[%s676] sm:$0xf]
          %v678 = vadd.f32 %v677, %v663
          %679 = vst [vmem:[%s676] sm:$0xf] %v678
        $region56: #{tpu_custom_call.1} parent=35 // pred_fallthru
          _
        %p680 = scmp.eq.s32.totalorder %s26, 3
        %p681 = scmp.eq.s32.totalorder %s27, 1
        %p682 = pnand %p680, %p681
        %p683 = pneg %p682
        // Predicated region
        $region57: #{tpu_custom_call.1} parent=35 // pred_check
          _
        $region58: #{tpu_custom_call.1} parent=35 // pred_check_branch
          %685 = sbr.rel (%p682) target = $region60
        $region59: #{tpu_custom_call.1} parent=35 // pred_region
          %v686 = vld [vmem:[#allocation2] sm:$0xff]
          %v687 = vld [vmem:[%s2] sm:$0x1]
          %v688 = vlaneseq
          %v689 = vshrl.u32 %v688, 7
          %v690 = vsub.s32 0, %v689
          %v691 = vrot.slane %v687, %v690
          %v692 = vadd.f32 %v686, %v691
          %v693 = vrot.slane %v692, 4
          %v694 = vadd.f32 %v692, %v693
          %v695 = vrot.slane %v694, 2
          %v696 = vadd.f32 %v694, %v695
          %v697 = vrot.slane %v696, 1
          %v698 = vadd.f32 %v696, %v697
          %v699 = vrcp.pop 8.0
          %v700 = vmul.f32 %v698, %v699
          %v701 = vsub.f32 %v692, %v700
          %v702 = vmul.f32 %v701, %v701
          %v703 = vrot.slane %v702, 4
          %v704 = vadd.f32 %v702, %v703
          %v705 = vrot.slane %v704, 2
          %v706 = vadd.f32 %v704, %v705
          %v707 = vrot.slane %v706, 1
          %v708 = vadd.f32 %v706, %v707
          %v709 = vmul.f32 %v708, %v699
          %v710 = vadd.f32 %v709, 1e-05
          %v711 = vrsqrt.pop %v710
          %v712 = vmul.f32 %v701, %v711
          %v713 = vld [vmem:[%s2 + $0x1] sm:$0x1]
          %v714 = vlaneseq
          %v715 = vshrl.u32 %v714, 7
          %v716 = vsub.s32 0, %v715
          %v717 = vrot.slane %v713, %v716
          %v718 = vmul.f32 %v712, %v717
          %v719 = vld [vmem:[%s2 + $0x2] sm:$0x1]
          %v720 = vlaneseq
          %v721 = vshrl.u32 %v720, 7
          %v722 = vsub.s32 0, %v721
          %v723 = vrot.slane %v719, %v722
          %v724 = vadd.f32 %v718, %v723
          %v725 = vmax.f32 %v724, 0.0
          %v726 = vld [vmem:[%s3] sm:$0xff]
          %v727 = vld [vmem:[%s3 + $0x8] sm:$0xff]
          %v728 = vld [vmem:[%s3 + $0x10] sm:$0xff]
          %v729 = vld [vmem:[%s3 + $0x18] sm:$0xff]
          %v730 = vld [vmem:[%s3 + $0x20] sm:$0xff]
          %v731 = vld [vmem:[%s3 + $0x28] sm:$0xff]
          %v732 = vld [vmem:[%s3 + $0x30] sm:$0xff]
          %v733 = vld [vmem:[%s3 + $0x38] sm:$0xff]
          %v734 = vld [vmem:[%s3 + $0x40] sm:$0xff]
          %v735 = vld [vmem:[%s3 + $0x48] sm:$0xff]
          %v736 = vld [vmem:[%s3 + $0x50] sm:$0xff]
          %v737 = vld [vmem:[%s3 + $0x58] sm:$0xff]
          %v738 = vld [vmem:[%s3 + $0x60] sm:$0xff]
          %v739 = vld [vmem:[%s3 + $0x68] sm:$0xff]
          %v740 = vld [vmem:[%s3 + $0x70] sm:$0xff]
          %v741 = vld [vmem:[%s3 + $0x78] sm:$0xff]
          %742 = vmatprep.subr.mxu0 0.0
          %743 = vmatpush1.msra.mxu0 %v726
          %744 = vmatprep.subr.mxu0 0.0
          %745 = vmatpush1.msra.mxu0 %v727
          %746 = vmatprep.subr.mxu0 0.0
          %747 = vmatpush1.msra.mxu0 %v728
          %748 = vmatprep.subr.mxu0 0.0
          %749 = vmatpush1.msra.mxu0 %v729
          %750 = vmatprep.subr.mxu0 0.0
          %751 = vmatpush1.msra.mxu0 %v730
          %752 = vmatprep.subr.mxu0 0.0
          %753 = vmatpush1.msra.mxu0 %v731
          %754 = vmatprep.subr.mxu0 0.0
          %755 = vmatpush1.msra.mxu0 %v732
          %756 = vmatprep.subr.mxu0 0.0
          %757 = vmatpush1.msra.mxu0 %v733
          %758 = vmatprep.subr.mxu0 0.0
          %759 = vmatpush1.msra.mxu0 %v734
          %760 = vmatprep.subr.mxu0 0.0
          %761 = vmatpush1.msra.mxu0 %v735
          %762 = vmatprep.subr.mxu0 0.0
          %763 = vmatpush1.msra.mxu0 %v736
          %764 = vmatprep.subr.mxu0 0.0
          %765 = vmatpush1.msra.mxu0 %v737
          %766 = vmatprep.subr.mxu0 0.0
          %767 = vmatpush1.msra.mxu0 %v738
          %768 = vmatprep.subr.mxu0 0.0
          %769 = vmatpush1.msra.mxu0 %v739
          %770 = vmatprep.subr.mxu0 0.0
          %771 = vmatpush1.msra.mxu0 %v740
          %772 = vmatprep.subr.mxu0 0.0
          %773 = vmatpush1.msra.mxu0 %v741
          %774 = vmatprep.subr.mxu0 0.0
          %775 = vmatpush1.msra.mxu0 0.0
          %776 = vmatprep.subr.mxu0 0.0
          %777 = vmatpush1.msra.mxu0 0.0
          %778 = vmatprep.subr.mxu0 0.0
          %779 = vmatpush1.msra.mxu0 0.0
          %780 = vmatprep.subr.mxu0 0.0
          %781 = vmatpush1.msra.mxu0 0.0
          %782 = vmatprep.subr.mxu0 0.0
          %783 = vmatpush1.msra.mxu0 0.0
          %784 = vmatprep.subr.mxu0 0.0
          %785 = vmatpush1.msra.mxu0 0.0
          %786 = vmatprep.subr.mxu0 0.0
          %787 = vmatpush1.msra.mxu0 0.0
          %788 = vmatprep.subr.mxu0 0.0
          %789 = vmatpush1.msra.mxu0 0.0
          %790 = vmatprep.subr.mxu0 0.0
          %791 = vmatpush1.msra.mxu0 0.0
          %792 = vmatprep.subr.mxu0 0.0
          %793 = vmatpush1.msra.mxu0 0.0
          %794 = vmatprep.subr.mxu0 0.0
          %795 = vmatpush1.msra.mxu0 0.0
          %796 = vmatprep.subr.mxu0 0.0
          %797 = vmatpush1.msra.mxu0 0.0
          %798 = vmatprep.subr.mxu0 0.0
          %799 = vmatpush1.msra.mxu0 0.0
          %800 = vmatprep.subr.mxu0 0.0
          %801 = vmatpush1.msra.mxu0 0.0
          %802 = vmatprep.subr.mxu0 0.0
          %803 = vmatpush1.msra.mxu0 0.0
          %804 = vmatprep.subr.mxu0 0.0
          %805 = vmatpush1.msra.mxu0 0.0
          %806 = vmatprep.mubr.f32.mxu0 0.0
          %807 = vmatmul.mubr.f32.gmra.mrb[0].mxu0 %v725
          %v808 = vpop.f32.mrb[0].mxu0
          %v809 = vadd.f32 0.0, %v808
          %v810 = vpop.f32.mrb[0].mxu0
          %811 = vdwg.mxu0
          %812 = vst.msk [vmem:[#allocation9] sm:$0xff] %vm316, %v809
        $region60: #{tpu_custom_call.1} parent=35 // pred_fallthru
          _
        // Predicated region
        $region61: #{tpu_custom_call.1} parent=35 // pred_check
          %p813 = pneg %p143
        $region62: #{tpu_custom_call.1} parent=35 // pred_check_branch
          %815 = sbr.rel (%p813) target = $region64
        $region63: #{tpu_custom_call.1} parent=35 // pred_region
          %s817 = ssub.s32 128, 128
          %818 = vsyncadd [#allocation6], %s817
          %s820 = sshll.u32 [#allocation9], 4
          %s821 = int_to_ptr.vmem [resolvable:$true] %s820
          %823 = dma.vmem_to_hbm [thread:$0]  %s821, 128, %s4, [#allocation6]
        $region64: #{tpu_custom_call.1} parent=35 // pred_fallthru
          _
        // Predicated region
        $region65: #{tpu_custom_call.1} parent=35 // pred_check
          %p824 = pneg %p143
        $region66: #{tpu_custom_call.1} parent=35 // pred_check_branch
          %826 = sbr.rel (%p824) target = $region68
        $region67: #{tpu_custom_call.1} parent=35 // pred_region
          %827 = dma.done [#allocation6], 128
        $region68: #{tpu_custom_call.1} parent=35 // pred_fallthru
          _
      $region36: #{tpu_custom_call.1} parent=5 // pred_fallthru
        _
      %p828 = scmp.le.s32.totalorder 2, %s17
      // Predicated region
      $region69: #{tpu_custom_call.1} parent=5 // pred_check
        %p829 = pneg %p828
      $region70: #{tpu_custom_call.1} parent=5 // pred_check_branch
        %831 = sbr.rel (%p829) target = $region72
      $region71: #{tpu_custom_call.1} parent=5 // pred_region
        %s832 = ssub.s32 %s17, 2
      $region72: #{tpu_custom_call.1} parent=5 // pred_fallthru
        _
    $region6: #{tpu_custom_call.1} parent=1 // loop_footer
      %s21 = sadd.s32 1, %s17
    $region7: #{tpu_custom_call.1} parent=1 // loop_footer_branch
      %16 = sbr.rel target = $region3
    $region8: #{tpu_custom_call.1} parent=1 // loop_exit
      _
    %833 = vsyncpa [#allocation5], 1
    %s834 = scalar_lea.sflag [#allocation5], 1
    %835 = vsyncpa %s834, 1
    %836 = vsyncpa [#allocation8], 1
    %s837 = scalar_lea.sflag [#allocation8], 1
    %838 = vsyncpa %s837, 1
    %839 = vsyncpa [#allocation6], 1
    %s840 = scalar_lea.sflag [#allocation6], 1
    %841 = vsyncpa %s840, 1

</llo_original>
